<compile_context>
chip_gen: v7x
topology: tpu7x:2x2x1
jax: 0.10.0
libtpu: 0.0.40
codegen_flags: <defaults>
</compile_context>

<pallas_src>
import math

import jax
import jax.numpy as jnp
from jax.experimental import pallas as pl
from jax.experimental.pallas import tpu as pltpu


TB = 8  # context-sets processed per grid step (gives (8, H) output tiles)


# ----------------------------- Pallas kernel -------------------------------

def path_attention_kernel(idx_ref,      # VMEM (TB*N, 3) int32: packed column ids
                          w_ref,        # VMEM (V_all, H) bf16: folded gather+fc table (resident)
                          out_w_ref,    # VMEM (H, H) f32: output_fc.weight.T (resident)
                          vecs_ref,     # VMEM (3, H) f32: [fc_bias; attention; out_bias] (resident)
                          o_ref):       # VMEM (TB, H) f32 output tile
    tbn = idx_ref.shape[0]              # TB * N
    v_all, hdim = w_ref.shape
    tb = o_ref.shape[0]                 # TB
    n = tbn // tb                       # N path contexts per set

    # --- gather + concat + fc as ONE MXU matmul via a combined one-hot -------
    idx = idx_ref[...]                                                  # (TB*N, 3)
    cols = jax.lax.broadcasted_iota(jnp.int32, (tbn, v_all), 1)
    onehot = ((cols == idx[:, 0:1]) | (cols == idx[:, 1:2])
              | (cols == idx[:, 2:3])).astype(w_ref.dtype)              # (TB*N, V_all)

    fc_b = vecs_ref[0:1, :]                                              # (1, H)
    attn = vecs_ref[1:2, :]                                              # (1, H)
    out_b = vecs_ref[2:3, :]                                             # (1, H)

    # tanh(cat(s,p,e) @ fc.weight.T + b) == tanh(onehot @ W_all + b)
    h = jnp.tanh(jnp.dot(onehot, w_ref[...],
                         preferred_element_type=jnp.float32) + fc_b)     # (TB*N, H) f32

    # --- per-context-set attention softmax + weighted sum (all f32) ----------
    h3 = h.reshape(tb, n, hdim)                                          # (TB, N, H), layout no-op
    scores = jnp.sum(h3 * attn, axis=2, keepdims=True)                   # (TB, N, 1)
    scores = scores - jnp.max(scores, axis=1, keepdims=True)
    ew = jnp.exp(scores)
    weights = ew * pl.reciprocal(jnp.sum(ew, axis=1, keepdims=True),
                                 approx=True)                            # (TB, N, 1)
    code = jnp.sum(weights * h3, axis=1)                                 # (TB, H)

    # --- output projection (f32 matmul; dense (8,128) store) -----------------
    o_ref[...] = (jnp.dot(code, out_w_ref[...],
                          preferred_element_type=jnp.float32) + out_b)


def path_attention_forward(params, start_tokens, paths, end_tokens):
    """Batched fused forward. Inputs (B, N) int; returns (B, H) f32."""
    b, n = start_tokens.shape
    hdim = params["out_w_t"].shape[1]
    v_all = params["gather_fc_w"].shape[0]

    # Pack the three index streams into one (B*N, 3) array of column ids into
    # the stacked folded table (offsets baked in on the host side).
    s_col = start_tokens.astype(jnp.int32)
    p_col = paths.astype(jnp.int32) + params["path_col_offset"]
    e_col = end_tokens.astype(jnp.int32) + params["end_col_offset"]
    packed = jnp.stack([s_col, p_col, e_col], axis=-1)                   # (B, N, 3)

    b_pad = ((b + TB - 1) // TB) * TB
    if b_pad != b:
        packed = jnp.pad(packed, ((0, b_pad - b), (0, 0), (0, 0)))
    packed = packed.reshape(b_pad * n, 3)

    out = pl.pallas_call(
        path_attention_kernel,
        out_shape=jax.ShapeDtypeStruct((b_pad, hdim), jnp.float32),
        grid_spec=pltpu.PrefetchScalarGridSpec(
            num_scalar_prefetch=0,
            grid=(b_pad // TB,),
            in_specs=[
                pl.BlockSpec((TB * n, 3), lambda i: (i, 0)),             # per-step indices
                pl.BlockSpec((v_all, hdim), lambda i: (0, 0)),           # resident table
                pl.BlockSpec((hdim, hdim), lambda i: (0, 0)),            # resident out proj
                pl.BlockSpec((3, hdim), lambda i: (0, 0)),               # resident vectors
            ],
            out_specs=pl.BlockSpec((TB, hdim), lambda i: (i, 0)),
        ),
        compiler_params=pltpu.CompilerParams(
            dimension_semantics=("parallel",)),                          # v7x: 2 TCs split batch
    )(packed, params["gather_fc_w"], params["out_w_t"], params["vecs"])
    return out[:b]


model_forward = jax.jit(path_attention_forward)
# TODO(synk): the empty-path_contexts early return (zeros(H)) of the PyTorch
# module is a host-side special case, handled outside the kernel.


# --------------------------- parameters -------------------------------------

def xavier_uniform(key, shape, fan_in, fan_out):
    limit = math.sqrt(6.0 / (fan_in + fan_out))
    return jax.random.uniform(key, shape, jnp.float32, -limit, limit)


def _round8(x):
    return ((x + 7) // 8) * 8


def init_params(key, token_vocab, path_vocab, embedding_dim, hidden_dim):
    e, h = embedding_dim, hidden_dim
    ks = jax.random.split(key, 5)

    # Raw module-layout parameters (f32) -- used by the fidelity reference.
    token_embedding = xavier_uniform(ks[0], (token_vocab, e), e, token_vocab)
    path_embedding = xavier_uniform(ks[1], (path_vocab, e), e, path_vocab)
    fc_w = xavier_uniform(ks[2], (h, 3 * e), 3 * e, h)         # fc.weight
    fc_b = jnp.zeros((h,), jnp.float32)
    attention = 0.1 * jax.random.normal(ks[3], (h,), jnp.float32)
    out_w = xavier_uniform(ks[4], (h, h), h, h)                # output_fc.weight
    out_b = jnp.zeros((h,), jnp.float32)

    # Inference fold: pre-multiply the embedding tables by the matching fc
    # slabs, stack them (zero-padded to sublane multiples) into one table.
    w0 = fc_w[:, :e].T            # (E, H)
    w1 = fc_w[:, e:2 * e].T
    w2 = fc_w[:, 2 * e:].T
    t0 = token_embedding @ w0     # (Tv, H)
    p1 = path_embedding @ w1      # (Pv, H)
    t2 = token_embedding @ w2     # (Tv, H)

    tok_pad = _round8(token_vocab)
    path_pad = _round8(path_vocab)
    v_all = tok_pad + path_pad + tok_pad
    w_all = jnp.zeros((v_all, h), jnp.float32)
    w_all = w_all.at[:token_vocab].set(t0)
    w_all = w_all.at[tok_pad:tok_pad + path_vocab].set(p1)
    w_all = w_all.at[tok_pad + path_pad:tok_pad + path_pad + token_vocab].set(t2)

    kernel_params = {
        "gather_fc_w": w_all.astype(jnp.bfloat16),      # (V_all, H) bf16, resident
        "out_w_t": out_w.T,                             # (H, H) f32, resident
        "vecs": jnp.stack([fc_b, attention, out_b], 0), # (3, H) f32
        "path_col_offset": tok_pad,
        "end_col_offset": tok_pad + path_pad,
    }
    raw_params = {
        "token_embedding": token_embedding, "path_embedding": path_embedding,
        "fc_w": fc_w, "fc_b": fc_b, "attention": attention,
        "out_w": out_w, "out_b": out_b,
    }
    return kernel_params, raw_params


# --------------------------- pure-JAX references -----------------------------

def reference_forward_folded(params, start_tokens, paths, end_tokens):
    """Same folded math as the kernel, pure JAX f32, exact divide."""
    w_all = params["gather_fc_w"].astype(jnp.float32)
    fc_b, attn, out_b = params["vecs"]
    rows = (w_all[start_tokens]
            + w_all[paths + params["path_col_offset"]]
            + w_all[end_tokens + params["end_col_offset"]])            # (B, N, H)
    h = jnp.tanh(rows + fc_b)
    scores = jnp.einsum("bnh,h->bn", h, attn)
    w = jax.nn.softmax(scores, axis=1)
    code = jnp.einsum("bn,bnh->bh", w, h)
    return code @ params["out_w_t"] + out_b


def reference_forward_module(raw, start_tokens, paths, end_tokens):
    """Unfolded f32 math exactly mirroring the PyTorch module."""
    s = raw["token_embedding"][start_tokens]
    p = raw["path_embedding"][paths]
    e = raw["token_embedding"][end_tokens]
    ctx = jnp.concatenate([s, p, e], axis=-1)                           # (B, N, 3E)
    h = jnp.tanh(ctx @ raw["fc_w"].T + raw["fc_b"])
    scores = jnp.einsum("bnh,h->bn", h, raw["attention"])
    w = jax.nn.softmax(scores, axis=1)
    code = jnp.einsum("bn,bnh->bh", w, h)
    return code @ raw["out_w"].T + raw["out_b"]


# --------------------------------- main --------------------------------------

if __name__ == "__main__":
    token_vocab_size = 50
    path_vocab_size = 30
    embedding_dim = 128
    hidden_dim = 128
    num_contexts = 8          # N path contexts per set
    batch = 16                # B context-sets (amortizes launch/DMA; 2 grid steps)

    key = jax.random.PRNGKey(0)
    pkey, k1, k2, k3 = jax.random.split(key, 4)

    params, raw = init_params(pkey, token_vocab_size, path_vocab_size,
                              embedding_dim, hidden_dim)

    start_tokens = jax.random.randint(k1, (batch, num_contexts), 0, token_vocab_size)
    paths = jax.random.randint(k2, (batch, num_contexts), 0, path_vocab_size)
    end_tokens = jax.random.randint(k3, (batch, num_contexts), 0, token_vocab_size)

    out = model_forward(params, start_tokens, paths, end_tokens)
    out = jax.block_until_ready(out)
    assert out.shape == (batch, hidden_dim)

    # Kernel vs folded reference (same parameter values): only the approximate
    # EUP reciprocal in the softmax differs -> tight tolerance.
    ref_folded = reference_forward_folded(params, start_tokens, paths, end_tokens)
    assert jnp.allclose(out, ref_folded, atol=2e-3, rtol=2e-3), "mismatch vs folded ref"

    # Kernel vs the original (unfolded, f32) module math: extra bf16 rounding of
    # the folded table -> slightly looser tolerance.
    ref_module = reference_forward_module(raw, start_tokens, paths, end_tokens)
    assert jnp.allclose(out, ref_module, atol=1.5e-2, rtol=1.5e-2), "mismatch vs module ref"

    print("KERNEL_OK")
</pallas_src>

<mosaic_0001>
module attributes {stable_mosaic.version = 11 : i64} {
  func.func @path_attention_kernel(%arg0: i32, %arg1: memref<64x3xi32, #tpu.memory_space<vmem>>, %arg2: memref<144x128xbf16, #tpu.memory_space<vmem>>, %arg3: memref<128x128xf32, #tpu.memory_space<vmem>>, %arg4: memref<3x128xf32, #tpu.memory_space<vmem>>, %arg5: memref<8x128xf32, #tpu.memory_space<vmem>>) attributes {dimension_semantics = [#tpu.dimension_semantics<parallel>], iteration_bounds = array<i64: 2>, scalar_prefetch = 0 : i64, scratch_operands = 0 : i64, tpu.core_type = #tpu.core_type<tc>, window_params = [{transform_indices = @transform_0, window_bounds = array<i64: 64, 3>}, {pipeline_mode = #tpu.pipeline_mode<synchronous>, transform_indices = @transform_1, window_bounds = array<i64: 144, 128>}, {pipeline_mode = #tpu.pipeline_mode<synchronous>, transform_indices = @transform_2, window_bounds = array<i64: 128, 128>}, {pipeline_mode = #tpu.pipeline_mode<synchronous>, transform_indices = @transform_3, window_bounds = array<i64: 3, 128>}, {transform_indices = @transform_4, window_bounds = array<i64: 8, 128>}]} {
    %c0 = arith.constant 0 : index
    %c0_0 = arith.constant 0 : index
    %0 = vector.load %arg1[%c0, %c0_0] : memref<64x3xi32, #tpu.memory_space<vmem>>, vector<64x3xi32>
    %1 = tpu.iota {dimensions = array<i32: 1>} : vector<64x144xi32>
    %2 = vector.extract_strided_slice %0 {offsets = [0, 0], sizes = [64, 1], strides = [1, 1]} : vector<64x3xi32> to vector<64x1xi32>
    %3 = vector.broadcast %2 : vector<64x1xi32> to vector<64x144xi32>
    %4 = arith.cmpi eq, %1, %3 : vector<64x144xi32>
    %5 = vector.extract_strided_slice %0 {offsets = [0, 1], sizes = [64, 1], strides = [1, 1]} : vector<64x3xi32> to vector<64x1xi32>
    %6 = vector.broadcast %5 : vector<64x1xi32> to vector<64x144xi32>
    %7 = arith.cmpi eq, %1, %6 : vector<64x144xi32>
    %8 = arith.ori %4, %7 : vector<64x144xi1>
    %9 = vector.extract_strided_slice %0 {offsets = [0, 2], sizes = [64, 1], strides = [1, 1]} : vector<64x3xi32> to vector<64x1xi32>
    %10 = vector.broadcast %9 : vector<64x1xi32> to vector<64x144xi32>
    %11 = arith.cmpi eq, %1, %10 : vector<64x144xi32>
    %12 = arith.ori %8, %11 : vector<64x144xi1>
    %13 = arith.extui %12 : vector<64x144xi1> to vector<64x144xi32>
    %14 = arith.sitofp %13 : vector<64x144xi32> to vector<64x144xf32>
    %15 = arith.truncf %14 : vector<64x144xf32> to vector<64x144xbf16>
    %c0_1 = arith.constant 0 : index
    %c0_2 = arith.constant 0 : index
    %16 = vector.load %arg4[%c0_1, %c0_2] : memref<3x128xf32, #tpu.memory_space<vmem>>, vector<1x128xf32>
    %c1 = arith.constant 1 : index
    %c0_3 = arith.constant 0 : index
    %17 = vector.load %arg4[%c1, %c0_3] : memref<3x128xf32, #tpu.memory_space<vmem>>, vector<1x128xf32>
    %c2 = arith.constant 2 : index
    %c0_4 = arith.constant 0 : index
    %18 = vector.load %arg4[%c2, %c0_4] : memref<3x128xf32, #tpu.memory_space<vmem>>, vector<1x128xf32>
    %c0_5 = arith.constant 0 : index
    %c0_6 = arith.constant 0 : index
    %19 = vector.load %arg2[%c0_5, %c0_6] : memref<144x128xbf16, #tpu.memory_space<vmem>>, vector<144x128xbf16>
    %cst = arith.constant dense<0.000000e+00> : vector<64x128xf32>
    %20 = tpu.matmul %15, %19, %cst {dimension_numbers = #tpu.dot_dimension_numbers<[1], [0], [0], [1], [0, 0, 1, 1], [], []>} : vector<64x144xbf16>, vector<144x128xbf16>, vector<64x128xf32> -> vector<64x128xf32>
    %21 = vector.broadcast %16 : vector<1x128xf32> to vector<64x128xf32>
    %22 = arith.addf %20, %21 : vector<64x128xf32>
    %23 = math.tanh %22 : vector<64x128xf32>
    %24 = vector.shape_cast %23 : vector<64x128xf32> to vector<8x8x128xf32>
    %25 = vector.shape_cast %17 : vector<1x128xf32> to vector<1x1x128xf32>
    %26 = vector.broadcast %25 : vector<1x1x128xf32> to vector<8x8x128xf32>
    %27 = arith.mulf %24, %26 : vector<8x8x128xf32>
    %cst_7 = arith.constant dense<0.000000e+00> : vector<8x8xf32>
    %28 = vector.multi_reduction <add>, %27, %cst_7 [2] : vector<8x8x128xf32> to vector<8x8xf32>
    %29 = vector.shape_cast %28 : vector<8x8xf32> to vector<8x8x1xf32>
    %cst_8 = arith.constant dense<0xFF800000> : vector<8x1xf32>
    %30 = vector.multi_reduction <maximumf>, %29, %cst_8 [1] : vector<8x8x1xf32> to vector<8x1xf32>
    %31 = vector.shape_cast %30 : vector<8x1xf32> to vector<8x1x1xf32>
    %32 = vector.broadcast %31 : vector<8x1x1xf32> to vector<8x8x1xf32>
    %33 = arith.subf %29, %32 : vector<8x8x1xf32>
    %34 = math.exp %33 : vector<8x8x1xf32>
    %cst_9 = arith.constant dense<0.000000e+00> : vector<8x1xf32>
    %35 = vector.multi_reduction <add>, %34, %cst_9 [1] : vector<8x8x1xf32> to vector<8x1xf32>
    %36 = vector.shape_cast %35 : vector<8x1xf32> to vector<8x1x1xf32>
    %37 = tpu.reciprocal %36 {approx = true} : vector<8x1x1xf32> -> vector<8x1x1xf32>
    %38 = vector.broadcast %37 : vector<8x1x1xf32> to vector<8x8x1xf32>
    %39 = arith.mulf %34, %38 : vector<8x8x1xf32>
    %40 = vector.broadcast %39 : vector<8x8x1xf32> to vector<8x8x128xf32>
    %41 = arith.mulf %40, %24 : vector<8x8x128xf32>
    %cst_10 = arith.constant dense<0.000000e+00> : vector<8x128xf32>
    %42 = vector.multi_reduction <add>, %41, %cst_10 [1] : vector<8x8x128xf32> to vector<8x128xf32>
    %c0_11 = arith.constant 0 : index
    %c0_12 = arith.constant 0 : index
    %43 = vector.load %arg3[%c0_11, %c0_12] : memref<128x128xf32, #tpu.memory_space<vmem>>, vector<128x128xf32>
    %cst_13 = arith.constant dense<0.000000e+00> : vector<8x128xf32>
    %44 = tpu.matmul %42, %43, %cst_13 {dimension_numbers = #tpu.dot_dimension_numbers<[1], [0], [0], [1], [0, 0, 1, 1], [], []>} : vector<8x128xf32>, vector<128x128xf32>, vector<8x128xf32> -> vector<8x128xf32>
    %45 = vector.broadcast %18 : vector<1x128xf32> to vector<8x128xf32>
    %46 = arith.addf %44, %45 : vector<8x128xf32>
    %c0_14 = arith.constant 0 : index
    %c0_15 = arith.constant 0 : index
    %47 = vector.load %arg5[%c0_14, %c0_15] : memref<8x128xf32, #tpu.memory_space<vmem>>, vector<8x128xf32>
    tpu.vector_store %arg5[%c0_14, %c0_15], %46 {strides = array<i32>} : memref<8x128xf32, #tpu.memory_space<vmem>>, vector<8x128xf32>,
    return
  }
  func.func @transform_0(%arg0: i32) -> (i32, i32) {
    %c0_i32 = arith.constant 0 : i32
    %c0_i32_0 = arith.constant 0 : i32
    return %arg0, %c0_i32 : i32, i32
  }
  func.func @transform_1(%arg0: i32) -> (i32, i32) {
    %c0_i32 = arith.constant 0 : i32
    %c0_i32_0 = arith.constant 0 : i32
    %c0_i32_1 = arith.constant 0 : i32
    return %c0_i32, %c0_i32_0 : i32, i32
  }
  func.func @transform_2(%arg0: i32) -> (i32, i32) {
    %c0_i32 = arith.constant 0 : i32
    %c0_i32_0 = arith.constant 0 : i32
    %c0_i32_1 = arith.constant 0 : i32
    return %c0_i32, %c0_i32_0 : i32, i32
  }
  func.func @transform_3(%arg0: i32) -> (i32, i32) {
    %c0_i32 = arith.constant 0 : i32
    %c0_i32_0 = arith.constant 0 : i32
    %c0_i32_1 = arith.constant 0 : i32
    return %c0_i32, %c0_i32_0 : i32, i32
  }
  func.func @transform_4(%arg0: i32) -> (i32, i32) {
    %c0_i32 = arith.constant 0 : i32
    %c0_i32_0 = arith.constant 0 : i32
    return %arg0, %c0_i32 : i32, i32
  }
}

</mosaic_0001>

<llo_original>
// kernel: path_attention_forward.1
$region0: #{path_attention_forward.1}
  #allocation0 [shape = 'u32[]', space=smem, size = 0x4, offset = 0x4, fixed_abs, tag = 'smem constant byte address 0x4 - core index']
  #allocation1 [shape = 'u32[144,128]{1,0:T(1,128)}', space=vmem, size = 0x12000, scoped, tag = 'internal scratch']
  %s0 = inlined_call_operand.vmem [shape: s32[128,3], index: 0, kind: input, shape index: {}]
  %s1 = inlined_call_operand.vmem [shape: bf16[144,128], index: 1, kind: input, shape index: {}]
  %s2 = inlined_call_operand.vmem [shape: f32[128,128], index: 2, kind: input, shape index: {}]
  %s3 = inlined_call_operand.vmem [shape: f32[3,128], index: 3, kind: input, shape index: {}]
  %s4 = inlined_call_operand.hbm [shape: f32[16,128], index: 4, kind: output, shape index: {}]
  %s5 = sld [smem:[#allocation0]]
  $region49: #{path_attention_forward.1} parent=0
    _
  %s7 = ssub.s32 1, %s5
  %s8 = scalar_select 0, %s7, %s5
  $region1: #{path_attention_forward.1} parent=0
    #allocation2 [shape = 'u8[8192]{0}', space=vmem, size = 0x2000, scoped, tag = 'output window, operand 0']
    #allocation3 [shape = 's32[2]{0}', space=sflag, size = 0x8, scoped, tag = 'scoped memory for path_attention_forward.1']
    %9 = vsyncpa [#allocation3], 0
    %s10 = scalar_lea.sflag [#allocation3], 1
    %11 = vsyncpa %s10, 0
    loop: start=0, step=1, limit=4
    $region2: #{path_attention_forward.1} parent=1 // loop_pre_header
      _
    $region3: #{path_attention_forward.1} parent=1 // loop_header
      %s13 = sphi 0, %s17
      %p14 = scmp.ge.s32.totalorder %s13, 4
      %s23 = sphi 0, %s25
      %s26 = sphi 0, %s23
      %s27 = sphi 0, %s26
      %s43 = sphi 0, %s27
      %s47 = sphi 0, %s47
      %s49 = sphi 0, %s47
      %s50 = sphi 0, %s49
      %s64 = sphi 0, %s50
      %s68 = sphi 0, %s68
      %s70 = sphi 0, %s68
      %s71 = sphi 0, %s70
      %s85 = sphi 0, %s71
      %s89 = sphi 0, %s89
      %s91 = sphi 0, %s89
      %s92 = sphi 0, %s91
      %s106 = sphi 0, %s92
      %s112 = sphi 0, %s114
      %s115 = sphi 0, %s112
      %s116 = sphi 0, %s115
      %s132 = sphi 0, %s116
    $region4: #{path_attention_forward.1} parent=1 // loop_header_branch
      %16 = sbr.rel (%p14) target = $region8
    $region5: #{path_attention_forward.1} parent=1 // loop_body
      %s18 = ssub.s32 %s13, 1
      %s19 = ssub.s32 %s13, 2
      %s20 = sadd.s32 %s13, 1
      %s21 = ssub.s32 %s13, %s20
      %p22 = scmp.eq.s32.totalorder %s21, 0
      %s24 = sadd.s32 %s23, 1
      %s25 = scalar_select %p22, %s23, %s24
      %p28 = pneg %p22
      %p29 = scmp.eq.s32.totalorder %s13, 1
      %p30 = por %p28, %p29
      %p31 = scmp.ne.s32.totalorder %s23, %s26
      %p32 = scmp.eq.s32.totalorder %s13, 0
      %p33 = por %p31, %p32
      %p34 = scmp.ne.s32.totalorder %s23, %s26
      %p35 = scmp.eq.s32.totalorder %s18, 1
      %p36 = por %p34, %p35
      %p37 = scmp.ne.s32.totalorder %s26, %s27
      %p38 = scmp.eq.s32.totalorder %s18, 0
      %p39 = por %p37, %p38
      %p40 = scmp.ne.s32.totalorder %s26, %s27
      %p41 = scmp.eq.s32.totalorder %s19, 1
      %p42 = por %p40, %p41
      %p44 = scmp.ne.s32.totalorder %s27, %s43
      %p45 = scmp.eq.s32.totalorder %s19, 0
      %p46 = por %p44, %p45
      %s48 = sadd.s32 %s47, 1
      %p51 = scmp.eq.s32.totalorder %s13, 1
      %p52 = scmp.ne.s32.totalorder %s47, %s49
      %p53 = scmp.eq.s32.totalorder %s13, 0
      %p54 = por %p52, %p53
      %p55 = scmp.ne.s32.totalorder %s47, %s49
      %p56 = scmp.eq.s32.totalorder %s18, 1
      %p57 = por %p55, %p56
      %p58 = scmp.ne.s32.totalorder %s49, %s50
      %p59 = scmp.eq.s32.totalorder %s18, 0
      %p60 = por %p58, %p59
      %p61 = scmp.ne.s32.totalorder %s49, %s50
      %p62 = scmp.eq.s32.totalorder %s19, 1
      %p63 = por %p61, %p62
      %p65 = scmp.ne.s32.totalorder %s50, %s64
      %p66 = scmp.eq.s32.totalorder %s19, 0
      %p67 = por %p65, %p66
      %s69 = sadd.s32 %s68, 1
      %p72 = scmp.eq.s32.totalorder %s13, 1
      %p73 = scmp.ne.s32.totalorder %s68, %s70
      %p74 = scmp.eq.s32.totalorder %s13, 0
      %p75 = por %p73, %p74
      %p76 = scmp.ne.s32.totalorder %s68, %s70
      %p77 = scmp.eq.s32.totalorder %s18, 1
      %p78 = por %p76, %p77
      %p79 = scmp.ne.s32.totalorder %s70, %s71
      %p80 = scmp.eq.s32.totalorder %s18, 0
      %p81 = por %p79, %p80
      %p82 = scmp.ne.s32.totalorder %s70, %s71
      %p83 = scmp.eq.s32.totalorder %s19, 1
      %p84 = por %p82, %p83
      %p86 = scmp.ne.s32.totalorder %s71, %s85
      %p87 = scmp.eq.s32.totalorder %s19, 0
      %p88 = por %p86, %p87
      %s90 = sadd.s32 %s89, 1
      %p93 = scmp.eq.s32.totalorder %s13, 1
      %p94 = scmp.ne.s32.totalorder %s89, %s91
      %p95 = scmp.eq.s32.totalorder %s13, 0
      %p96 = por %p94, %p95
      %p97 = scmp.ne.s32.totalorder %s89, %s91
      %p98 = scmp.eq.s32.totalorder %s18, 1
      %p99 = por %p97, %p98
      %p100 = scmp.ne.s32.totalorder %s91, %s92
      %p101 = scmp.eq.s32.totalorder %s18, 0
      %p102 = por %p100, %p101
      %p103 = scmp.ne.s32.totalorder %s91, %s92
      %p104 = scmp.eq.s32.totalorder %s19, 1
      %p105 = por %p103, %p104
      %p107 = scmp.ne.s32.totalorder %s92, %s106
      %p108 = scmp.eq.s32.totalorder %s19, 0
      %p109 = por %p107, %p108
      %s110 = ssub.s32 %s13, %s20
      %p111 = scmp.eq.s32.totalorder %s110, 0
      %s113 = sadd.s32 %s112, 1
      %s114 = scalar_select %p111, %s112, %s113
      %p117 = pneg %p111
      %p118 = scmp.eq.s32.totalorder %s13, 1
      %p119 = por %p117, %p118
      %p120 = scmp.ne.s32.totalorder %s112, %s115
      %p121 = scmp.eq.s32.totalorder %s13, 0
      %p122 = por %p120, %p121
      %p123 = scmp.ne.s32.totalorder %s112, %s115
      %p124 = scmp.eq.s32.totalorder %s18, 1
      %p125 = por %p123, %p124
      %p126 = scmp.ne.s32.totalorder %s115, %s116
      %p127 = scmp.eq.s32.totalorder %s18, 0
      %p128 = por %p126, %p127
      %p129 = scmp.ne.s32.totalorder %s115, %s116
      %p130 = scmp.eq.s32.totalorder %s19, 1
      %p131 = por %p129, %p130
      %p133 = scmp.ne.s32.totalorder %s116, %s132
      %p134 = scmp.eq.s32.totalorder %s19, 0
      %p135 = por %p133, %p134
      %p136 = scmp.le.s32.totalorder 1, %s13
      %p137 = scmp.lt.s32.totalorder %s13, 3
      %p138 = pnand %p136, %p137
      %p139 = pneg %p138
      // Predicated region
      $region9: #{path_attention_forward.1} parent=5 // pred_check
        _
      $region10: #{path_attention_forward.1} parent=5 // pred_check_branch
        %141 = sbr.rel (%p138) target = $region12
      $region11: #{path_attention_forward.1} parent=5 // pred_region
        %s142 = ssub.s32 %s13, 1
        // Predicated region
        $region13: #{path_attention_forward.1} parent=11 // pred_check
          %p143 = pneg %p60
        $region14: #{path_attention_forward.1} parent=11 // pred_check_branch
          %145 = sbr.rel (%p143) target = $region16
        $region15: #{path_attention_forward.1} parent=11 // pred_region
          _
        $region16: #{path_attention_forward.1} parent=11 // pred_fallthru
          _
        // Predicated region
        $region17: #{path_attention_forward.1} parent=11 // pred_check
          %p146 = pneg %p81
        $region18: #{path_attention_forward.1} parent=11 // pred_check_branch
          %148 = sbr.rel (%p146) target = $region20
        $region19: #{path_attention_forward.1} parent=11 // pred_region
          _
        $region20: #{path_attention_forward.1} parent=11 // pred_fallthru
          _
        // Predicated region
        $region21: #{path_attention_forward.1} parent=11 // pred_check
          %p149 = pneg %p102
        $region22: #{path_attention_forward.1} parent=11 // pred_check_branch
          %151 = sbr.rel (%p149) target = $region24
        $region23: #{path_attention_forward.1} parent=11 // pred_region
          _
        $region24: #{path_attention_forward.1} parent=11 // pred_fallthru
          _
      $region12: #{path_attention_forward.1} parent=5 // pred_fallthru
        _
      %p152 = scmp.lt.s32.totalorder %s13, 2
      // Predicated region
      $region25: #{path_attention_forward.1} parent=5 // pred_check
        %p153 = pneg %p152
      $region26: #{path_attention_forward.1} parent=5 // pred_check_branch
        %155 = sbr.rel (%p153) target = $region28
      $region27: #{path_attention_forward.1} parent=5 // pred_region
        // Predicated region
        $region29: #{path_attention_forward.1} parent=27 // pred_check
          %p156 = pneg %p33
        $region30: #{path_attention_forward.1} parent=27 // pred_check_branch
          %158 = sbr.rel (%p156) target = $region32
        $region31: #{path_attention_forward.1} parent=27 // pred_region
          %s159 = smul.u32 8, %s13
          %p160 = scmp.lt.s32.totalorder %s159, 15
          %s161 = scalar_select %p160, %s159, 15
          %s162 = smul.addr %s161, 8
          %s163 = scalar_lea.vmem %s0, %s162
          %s164 = smul.u32 8, %s13
        $region32: #{path_attention_forward.1} parent=27 // pred_fallthru
          _
      $region28: #{path_attention_forward.1} parent=5 // pred_fallthru
        _
      %p165 = scmp.le.s32.totalorder 1, %s13
      %p166 = scmp.lt.s32.totalorder %s13, 3
      %p167 = pnand %p165, %p166
      %p168 = pneg %p167
      // Predicated region
      $region33: #{path_attention_forward.1} parent=5 // pred_check
        _
      $region34: #{path_attention_forward.1} parent=5 // pred_check_branch
        %170 = sbr.rel (%p167) target = $region36
      $region35: #{path_attention_forward.1} parent=5 // pred_region
        %s171 = ssub.s32 %s13, 1
        %s172 = smul.u32 8, %s18
        %p173 = scmp.lt.s32.totalorder %s172, 15
        %s174 = scalar_select %p173, %s172, 15
        %s175 = smul.addr %s174, 8
        %s176 = scalar_lea.vmem %s0, %s175
        %p177 = pneg %p39
        %p178 = pneg %p36
        %p179 = pneg %p60
        %p180 = pneg %p57
        %p181 = pneg %p81
        %p182 = pneg %p78
        %p183 = pneg %p102
        %p184 = pneg %p99
        %p185 = pneg %p128
        %p186 = pneg %p125
        %s187 = sand.u32 %s115, 1
        %s188 = scalar_lea.sflag [#allocation3], %s187
        %s189 = sand.u32 %s115, 1
        %s190 = smul.addr %s189, 8
        %s191 = scalar_lea.vmem [#allocation2], %s190
        %s192 = smul.u32 8, %s18
        %p193 = scmp.lt.s32.totalorder %s192, 15
        %s194 = scalar_select %p193, %s192, 15
        %s195 = smul.addr %s194, 8
        %s196 = scalar_lea.vmem %s0, %s195
        %s197 = smul.u32 8, %s18
        %v199 = vld [vmem:[%s196] sm:$0xff]
        %v200 = vld [vmem:[%s196 + $0x8] sm:$0xff]
        %v201 = vld [vmem:[%s196 + $0x10] sm:$0xff]
        %v202 = vld [vmem:[%s196 + $0x18] sm:$0xff]
        %v203 = vld [vmem:[%s196 + $0x20] sm:$0xff]
        %v204 = vld [vmem:[%s196 + $0x28] sm:$0xff]
        %v205 = vld [vmem:[%s196 + $0x30] sm:$0xff]
        %v206 = vld [vmem:[%s196 + $0x38] sm:$0xff]
        %v207 = vlaneseq
        %v208 = vand.u32 %v207, 127
        %v209 = vadd.s32 %v208, 128
        %210 = vset.pattern.permute.xlu0 0
        %211 = vperm.xlu0 %210, %v199
        %v212 = vpop.permute.xlu0 %211
        %213 = vset.pattern.permute.xlu0 0
        %214 = vperm.xlu0 %213, %v200
        %v215 = vpop.permute.xlu0 %214
        %216 = vset.pattern.permute.xlu0 0
        %217 = vperm.xlu0 %216, %v201
        %v218 = vpop.permute.xlu0 %217
        %219 = vset.pattern.permute.xlu0 0
        %220 = vperm.xlu0 %219, %v202
        %v221 = vpop.permute.xlu0 %220
        %222 = vset.pattern.permute.xlu0 0
        %223 = vperm.xlu0 %222, %v203
        %v224 = vpop.permute.xlu0 %223
        %225 = vset.pattern.permute.xlu0 0
        %226 = vperm.xlu0 %225, %v204
        %v227 = vpop.permute.xlu0 %226
        %228 = vset.pattern.permute.xlu0 0
        %229 = vperm.xlu0 %228, %v205
        %v230 = vpop.permute.xlu0 %229
        %231 = vset.pattern.permute.xlu0 0
        %232 = vperm.xlu0 %231, %v206
        %v233 = vpop.permute.xlu0 %232
        %vm234 = vcmp.eq.s32.totalorder %v208, %v212
        %vm235 = vcmp.eq.s32.totalorder %v209, %v212
        %vm236 = vcmp.eq.s32.totalorder %v208, %v215
        %vm237 = vcmp.eq.s32.totalorder %v209, %v215
        %vm238 = vcmp.eq.s32.totalorder %v208, %v218
        %vm239 = vcmp.eq.s32.totalorder %v209, %v218
        %vm240 = vcmp.eq.s32.totalorder %v208, %v221
        %vm241 = vcmp.eq.s32.totalorder %v209, %v221
        %vm242 = vcmp.eq.s32.totalorder %v208, %v224
        %vm243 = vcmp.eq.s32.totalorder %v209, %v224
        %vm244 = vcmp.eq.s32.totalorder %v208, %v227
        %vm245 = vcmp.eq.s32.totalorder %v209, %v227
        %vm246 = vcmp.eq.s32.totalorder %v208, %v230
        %vm247 = vcmp.eq.s32.totalorder %v209, %v230
        %vm248 = vcmp.eq.s32.totalorder %v208, %v233
        %vm249 = vcmp.eq.s32.totalorder %v209, %v233
        %250 = vset.pattern.permute.xlu0 1
        %251 = vperm.xlu0 %250, %v199
        %v252 = vpop.permute.xlu0 %251
        %253 = vset.pattern.permute.xlu0 1
        %254 = vperm.xlu0 %253, %v200
        %v255 = vpop.permute.xlu0 %254
        %256 = vset.pattern.permute.xlu0 1
        %257 = vperm.xlu0 %256, %v201
        %v258 = vpop.permute.xlu0 %257
        %259 = vset.pattern.permute.xlu0 1
        %260 = vperm.xlu0 %259, %v202
        %v261 = vpop.permute.xlu0 %260
        %262 = vset.pattern.permute.xlu0 1
        %263 = vperm.xlu0 %262, %v203
        %v264 = vpop.permute.xlu0 %263
        %265 = vset.pattern.permute.xlu0 1
        %266 = vperm.xlu0 %265, %v204
        %v267 = vpop.permute.xlu0 %266
        %268 = vset.pattern.permute.xlu0 1
        %269 = vperm.xlu0 %268, %v205
        %v270 = vpop.permute.xlu0 %269
        %271 = vset.pattern.permute.xlu0 1
        %272 = vperm.xlu0 %271, %v206
        %v273 = vpop.permute.xlu0 %272
        %vm274 = vcmp.eq.s32.totalorder %v208, %v252
        %vm275 = vcmp.eq.s32.totalorder %v209, %v252
        %vm276 = vcmp.eq.s32.totalorder %v208, %v255
        %vm277 = vcmp.eq.s32.totalorder %v209, %v255
        %vm278 = vcmp.eq.s32.totalorder %v208, %v258
        %vm279 = vcmp.eq.s32.totalorder %v209, %v258
        %vm280 = vcmp.eq.s32.totalorder %v208, %v261
        %vm281 = vcmp.eq.s32.totalorder %v209, %v261
        %vm282 = vcmp.eq.s32.totalorder %v208, %v264
        %vm283 = vcmp.eq.s32.totalorder %v209, %v264
        %vm284 = vcmp.eq.s32.totalorder %v208, %v267
        %vm285 = vcmp.eq.s32.totalorder %v209, %v267
        %vm286 = vcmp.eq.s32.totalorder %v208, %v270
        %vm287 = vcmp.eq.s32.totalorder %v209, %v270
        %vm288 = vcmp.eq.s32.totalorder %v208, %v273
        %vm289 = vcmp.eq.s32.totalorder %v209, %v273
        %vm290 = vmor %vm234, %vm274
        %vm291 = vmor %vm235, %vm275
        %vm292 = vmor %vm236, %vm276
        %vm293 = vmor %vm237, %vm277
        %vm294 = vmor %vm238, %vm278
        %vm295 = vmor %vm239, %vm279
        %vm296 = vmor %vm240, %vm280
        %vm297 = vmor %vm241, %vm281
        %vm298 = vmor %vm242, %vm282
        %vm299 = vmor %vm243, %vm283
        %vm300 = vmor %vm244, %vm284
        %vm301 = vmor %vm245, %vm285
        %vm302 = vmor %vm246, %vm286
        %vm303 = vmor %vm247, %vm287
        %vm304 = vmor %vm248, %vm288
        %vm305 = vmor %vm249, %vm289
        %306 = vset.pattern.permute.xlu0 2
        %307 = vperm.xlu0 %306, %v199
        %v308 = vpop.permute.xlu0 %307
        %309 = vset.pattern.permute.xlu0 2
        %310 = vperm.xlu0 %309, %v200
        %v311 = vpop.permute.xlu0 %310
        %312 = vset.pattern.permute.xlu0 2
        %313 = vperm.xlu0 %312, %v201
        %v314 = vpop.permute.xlu0 %313
        %315 = vset.pattern.permute.xlu0 2
        %316 = vperm.xlu0 %315, %v202
        %v317 = vpop.permute.xlu0 %316
        %318 = vset.pattern.permute.xlu0 2
        %319 = vperm.xlu0 %318, %v203
        %v320 = vpop.permute.xlu0 %319
        %321 = vset.pattern.permute.xlu0 2
        %322 = vperm.xlu0 %321, %v204
        %v323 = vpop.permute.xlu0 %322
        %324 = vset.pattern.permute.xlu0 2
        %325 = vperm.xlu0 %324, %v205
        %v326 = vpop.permute.xlu0 %325
        %327 = vset.pattern.permute.xlu0 2
        %328 = vperm.xlu0 %327, %v206
        %v329 = vpop.permute.xlu0 %328
        %vm330 = vcmp.eq.s32.totalorder %v208, %v308
        %vm331 = vcmp.eq.s32.totalorder %v209, %v308
        %vm332 = vcmp.eq.s32.totalorder %v208, %v311
        %vm333 = vcmp.eq.s32.totalorder %v209, %v311
        %vm334 = vcmp.eq.s32.totalorder %v208, %v314
        %vm335 = vcmp.eq.s32.totalorder %v209, %v314
        %vm336 = vcmp.eq.s32.totalorder %v208, %v317
        %vm337 = vcmp.eq.s32.totalorder %v209, %v317
        %vm338 = vcmp.eq.s32.totalorder %v208, %v320
        %vm339 = vcmp.eq.s32.totalorder %v209, %v320
        %vm340 = vcmp.eq.s32.totalorder %v208, %v323
        %vm341 = vcmp.eq.s32.totalorder %v209, %v323
        %vm342 = vcmp.eq.s32.totalorder %v208, %v326
        %vm343 = vcmp.eq.s32.totalorder %v209, %v326
        %vm344 = vcmp.eq.s32.totalorder %v208, %v329
        %vm345 = vcmp.eq.s32.totalorder %v209, %v329
        %vm346 = vmor %vm290, %vm330
        %vm347 = vmor %vm291, %vm331
        %vm348 = vmor %vm292, %vm332
        %vm349 = vmor %vm293, %vm333
        %vm350 = vmor %vm294, %vm334
        %vm351 = vmor %vm295, %vm335
        %vm352 = vmor %vm296, %vm336
        %vm353 = vmor %vm297, %vm337
        %vm354 = vmor %vm298, %vm338
        %vm355 = vmor %vm299, %vm339
        %vm356 = vmor %vm300, %vm340
        %vm357 = vmor %vm301, %vm341
        %vm358 = vmor %vm302, %vm342
        %vm359 = vmor %vm303, %vm343
        %vm360 = vmor %vm304, %vm344
        %vm361 = vmor %vm305, %vm345
        %v362 = vsel %vm346, 1, 0
        %v363 = vsel %vm347, 1, 0
        %v364 = vsel %vm348, 1, 0
        %v365 = vsel %vm349, 1, 0
        %v366 = vsel %vm350, 1, 0
        %v367 = vsel %vm351, 1, 0
        %v368 = vsel %vm352, 1, 0
        %v369 = vsel %vm353, 1, 0
        %v370 = vsel %vm354, 1, 0
        %v371 = vsel %vm355, 1, 0
        %v372 = vsel %vm356, 1, 0
        %v373 = vsel %vm357, 1, 0
        %v374 = vsel %vm358, 1, 0
        %v375 = vsel %vm359, 1, 0
        %v376 = vsel %vm360, 1, 0
        %v377 = vsel %vm361, 1, 0
        %v378 = vcvt.s32.f32 %v362
        %v379 = vcvt.s32.f32 %v363
        %v380 = vcvt.s32.f32 %v364
        %v381 = vcvt.s32.f32 %v365
        %v382 = vcvt.s32.f32 %v366
        %v383 = vcvt.s32.f32 %v367
        %v384 = vcvt.s32.f32 %v368
        %v385 = vcvt.s32.f32 %v369
        %v386 = vcvt.s32.f32 %v370
        %v387 = vcvt.s32.f32 %v371
        %v388 = vcvt.s32.f32 %v372
        %v389 = vcvt.s32.f32 %v373
        %v390 = vcvt.s32.f32 %v374
        %v391 = vcvt.s32.f32 %v375
        %v392 = vcvt.s32.f32 %v376
        %v393 = vcvt.s32.f32 %v377
        %v394 = vpack.c.bf16 %v380, %v378
        %v395 = vpack.c.bf16 %v381, %v379
        %v396 = vpack.c.bf16 %v384, %v382
        %v397 = vpack.c.bf16 %v385, %v383
        %v398 = vpack.c.bf16 %v388, %v386
        %v399 = vpack.c.bf16 %v389, %v387
        %v400 = vpack.c.bf16 %v392, %v390
        %v401 = vpack.c.bf16 %v393, %v391
        %v402 = vld [vmem:[%s3] sm:$0x1]
        %v403 = vld [vmem:[%s3 + $0x1] sm:$0x1]
        %v404 = vld [vmem:[%s3 + $0x2] sm:$0x1]
        %v405 = vld [vmem:[%s1] sm:$0xf]
        %v406 = vld [vmem:[%s1 + $0x4] sm:$0xf]
        %v407 = vld [vmem:[%s1 + $0x8] sm:$0xf]
        %v408 = vld [vmem:[%s1 + $0xc] sm:$0xf]
        %v409 = vld [vmem:[%s1 + $0x10] sm:$0xf]
        %v410 = vld [vmem:[%s1 + $0x14] sm:$0xf]
        %v411 = vld [vmem:[%s1 + $0x18] sm:$0xf]
        %v412 = vld [vmem:[%s1 + $0x1c] sm:$0xf]
        %v413 = vld [vmem:[%s1 + $0x20] sm:$0xf]
        %v414 = vld [vmem:[%s1 + $0x24] sm:$0xf]
        %v415 = vld [vmem:[%s1 + $0x28] sm:$0xf]
        %v416 = vld [vmem:[%s1 + $0x2c] sm:$0xf]
        %v417 = vld [vmem:[%s1 + $0x30] sm:$0xf]
        %v418 = vld [vmem:[%s1 + $0x34] sm:$0xf]
        %v419 = vld [vmem:[%s1 + $0x38] sm:$0xf]
        %v420 = vld [vmem:[%s1 + $0x3c] sm:$0xf]
        %v421 = vld [vmem:[%s1 + $0x40] sm:$0xf]
        %v422 = vld [vmem:[%s1 + $0x44] sm:$0xf]
        %v423 = vlaneseq
        %v424 = vshrl.u32 %v423, 7
        %v425 = vsub.s32 0, %v424
        %v426 = vrot.slane %v402, %v425
        %v445 = vunpack.c.l.b16 %v405
        %v446 = vunpack.c.l.b16 %v406
        %v447 = vunpack.c.l.b16 %v407
        %v448 = vunpack.c.l.b16 %v408
        %v449 = vunpack.c.l.b16 %v409
        %v450 = vunpack.c.l.b16 %v410
        %v451 = vunpack.c.l.b16 %v411
        %v452 = vunpack.c.l.b16 %v412
        %v453 = vunpack.c.l.b16 %v413
        %v454 = vunpack.c.l.b16 %v414
        %v455 = vunpack.c.l.b16 %v415
        %v456 = vunpack.c.l.b16 %v416
        %v457 = vunpack.c.l.b16 %v417
        %v458 = vunpack.c.l.b16 %v418
        %v459 = vunpack.c.l.b16 %v419
        %v460 = vunpack.c.l.b16 %v420
        %v461 = vunpack.c.l.b16 %v421
        %v462 = vunpack.c.l.b16 %v422
        %v463 = vpack.c.b16 %v446, %v445
        %v464 = vpack.c.b16 %v448, %v447
        %v465 = vpack.c.b16 %v450, %v449
        %v466 = vpack.c.b16 %v452, %v451
        %v467 = vpack.c.b16 %v454, %v453
        %v468 = vpack.c.b16 %v456, %v455
        %v469 = vpack.c.b16 %v458, %v457
        %v470 = vpack.c.b16 %v460, %v459
        %v471 = vpack.c.b16 %v462, %v461
        %vm481 = vcmask 130048
        %v483 = vsel %vm481, %v395, 0
        %v486 = vsel %vm481, %v397, 0
        %v489 = vsel %vm481, %v399, 0
        %v492 = vsel %vm481, %v401, 0
        %494 = vmatprep.subr.bf16.mxu0 0
        %495 = vmatpush1.bf16.msra.mxu0 %v463
        %496 = vmatprep.subr.bf16.mxu0 0
        %497 = vmatpush1.bf16.msra.mxu0 %v464
        %498 = vmatprep.subr.bf16.mxu0 0
        %499 = vmatpush1.bf16.msra.mxu0 %v465
        %500 = vmatprep.subr.bf16.mxu0 0
        %501 = vmatpush1.bf16.msra.mxu0 %v466
        %502 = vmatprep.subr.bf16.mxu0 0
        %503 = vmatpush1.bf16.msra.mxu0 %v467
        %504 = vmatprep.subr.bf16.mxu0 0
        %505 = vmatpush1.bf16.msra.mxu0 %v468
        %506 = vmatprep.subr.bf16.mxu0 0
        %507 = vmatpush1.bf16.msra.mxu0 %v469
        %508 = vmatprep.subr.bf16.mxu0 0
        %509 = vmatpush1.bf16.msra.mxu0 %v470
        %510 = vmatprep.subr.bf16.mxu0 0
        %511 = vmatpush1.bf16.msra.mxu0 %v471
        %512 = vmatprep.subr.bf16.mxu0 0
        %513 = vmatpush1.bf16.msra.mxu0 0
        %514 = vmatprep.subr.bf16.mxu0 0
        %515 = vmatpush1.bf16.msra.mxu0 0
        %516 = vmatprep.subr.bf16.mxu0 0
        %517 = vmatpush1.bf16.msra.mxu0 0
        %518 = vmatprep.subr.bf16.mxu0 0
        %519 = vmatpush1.bf16.msra.mxu0 0
        %520 = vmatprep.subr.bf16.mxu0 0
        %521 = vmatpush1.bf16.msra.mxu0 0
        %522 = vmatprep.subr.bf16.mxu0 0
        %523 = vmatpush1.bf16.msra.mxu0 0
        %524 = vmatprep.subr.bf16.mxu0 0
        %525 = vmatpush1.bf16.msra.mxu0 0
        %526 = vmatprep.mubr.bf16.mxu0 %v483
        %527 = vmatmul.mubr.bf16.gmra.mrb[0].mxu0 %v394
        %v528 = vpop.f32.mrb[0].mxu0
        %v529 = vadd.f32 %v426, %v528
        %v530 = vpop.f32.mrb[0].mxu0
        %v531 = vpop.f32.mrb[0].mxu0
        %v532 = vadd.f32 %v426, %v531
        %v533 = vpop.f32.mrb[0].mxu0
        %534 = vmatprep.mubr.bf16.mxu0 %v486
        %535 = vmatmul.mubr.bf16.gmra.mrb[0].mxu0 %v396
        %v536 = vpop.f32.mrb[0].mxu0
        %v537 = vadd.f32 %v426, %v536
        %v538 = vpop.f32.mrb[0].mxu0
        %v539 = vpop.f32.mrb[0].mxu0
        %v540 = vadd.f32 %v426, %v539
        %v541 = vpop.f32.mrb[0].mxu0
        %542 = vmatprep.mubr.bf16.mxu0 %v489
        %543 = vmatmul.mubr.bf16.gmra.mrb[0].mxu0 %v398
        %v544 = vpop.f32.mrb[0].mxu0
        %v545 = vadd.f32 %v426, %v544
        %v546 = vpop.f32.mrb[0].mxu0
        %v547 = vpop.f32.mrb[0].mxu0
        %v548 = vadd.f32 %v426, %v547
        %v549 = vpop.f32.mrb[0].mxu0
        %550 = vmatprep.mubr.bf16.mxu0 %v492
        %551 = vmatmul.mubr.bf16.gmra.mrb[0].mxu0 %v400
        %v552 = vpop.f32.mrb[0].mxu0
        %v553 = vadd.f32 %v426, %v552
        %v554 = vpop.f32.mrb[0].mxu0
        %v555 = vpop.f32.mrb[0].mxu0
        %v556 = vadd.f32 %v426, %v555
        %v557 = vpop.f32.mrb[0].mxu0
        %558 = vdwg.mxu0
        %v559 = vtanh.pop %v529
        %v560 = vtanh.pop %v532
        %v561 = vtanh.pop %v537
        %v562 = vtanh.pop %v540
        %v563 = vtanh.pop %v545
        %v564 = vtanh.pop %v548
        %v565 = vtanh.pop %v553
        %v566 = vtanh.pop %v556
        %v567 = vlaneseq
        %v568 = vshrl.u32 %v567, 7
        %v569 = vsub.s32 0, %v568
        %v570 = vrot.slane %v403, %v569
        %v571 = vmul.f32 %v559, %v570
        %v572 = vmul.f32 %v560, %v570
        %v573 = vmul.f32 %v561, %v570
        %v574 = vmul.f32 %v562, %v570
        %v575 = vmul.f32 %v563, %v570
        %v576 = vmul.f32 %v564, %v570
        %v577 = vmul.f32 %v565, %v570
        %v578 = vmul.f32 %v566, %v570
        %579 = vadd.xlane.f32.xlu0 %v571
        %v580 = vpop.xlane.xlu0 %579
        %581 = vadd.xlane.f32.xlu0 %v572
        %v582 = vpop.xlane.xlu0 %581
        %583 = vadd.xlane.f32.xlu0 %v573
        %v584 = vpop.xlane.xlu0 %583
        %585 = vadd.xlane.f32.xlu0 %v574
        %v586 = vpop.xlane.xlu0 %585
        %587 = vadd.xlane.f32.xlu0 %v575
        %v588 = vpop.xlane.xlu0 %587
        %589 = vadd.xlane.f32.xlu0 %v576
        %v590 = vpop.xlane.xlu0 %589
        %591 = vadd.xlane.f32.xlu0 %v577
        %v592 = vpop.xlane.xlu0 %591
        %593 = vadd.xlane.f32.xlu0 %v578
        %v594 = vpop.xlane.xlu0 %593
        %v595 = vrot.slane %v580, 4
        %v596 = vmax.f32 %v580, %v595
        %v597 = vrot.slane %v596, 2
        %v598 = vmax.f32 %v596, %v597
        %v599 = vrot.slane %v598, 1
        %v600 = vmax.f32 %v598, %v599
        %v601 = vrot.slane %v582, 4
        %v602 = vmax.f32 %v582, %v601
        %v603 = vrot.slane %v602, 2
        %v604 = vmax.f32 %v602, %v603
        %v605 = vrot.slane %v604, 1
        %v606 = vmax.f32 %v604, %v605
        %v607 = vrot.slane %v584, 4
        %v608 = vmax.f32 %v584, %v607
        %v609 = vrot.slane %v608, 2
        %v610 = vmax.f32 %v608, %v609
        %v611 = vrot.slane %v610, 1
        %v612 = vmax.f32 %v610, %v611
        %v613 = vrot.slane %v586, 4
        %v614 = vmax.f32 %v586, %v613
        %v615 = vrot.slane %v614, 2
        %v616 = vmax.f32 %v614, %v615
        %v617 = vrot.slane %v616, 1
        %v618 = vmax.f32 %v616, %v617
        %v619 = vrot.slane %v588, 4
        %v620 = vmax.f32 %v588, %v619
        %v621 = vrot.slane %v620, 2
        %v622 = vmax.f32 %v620, %v621
        %v623 = vrot.slane %v622, 1
        %v624 = vmax.f32 %v622, %v623
        %v625 = vrot.slane %v590, 4
        %v626 = vmax.f32 %v590, %v625
        %v627 = vrot.slane %v626, 2
        %v628 = vmax.f32 %v626, %v627
        %v629 = vrot.slane %v628, 1
        %v630 = vmax.f32 %v628, %v629
        %v631 = vrot.slane %v592, 4
        %v632 = vmax.f32 %v592, %v631
        %v633 = vrot.slane %v632, 2
        %v634 = vmax.f32 %v632, %v633
        %v635 = vrot.slane %v634, 1
        %v636 = vmax.f32 %v634, %v635
        %v637 = vrot.slane %v594, 4
        %v638 = vmax.f32 %v594, %v637
        %v639 = vrot.slane %v638, 2
        %v640 = vmax.f32 %v638, %v639
        %v641 = vrot.slane %v640, 1
        %v642 = vmax.f32 %v640, %v641
        %v643 = vsub.f32 %v580, %v600
        %v644 = vsub.f32 %v582, %v606
        %v645 = vsub.f32 %v584, %v612
        %v646 = vsub.f32 %v586, %v618
        %v647 = vsub.f32 %v588, %v624
        %v648 = vsub.f32 %v590, %v630
        %v649 = vsub.f32 %v592, %v636
        %v650 = vsub.f32 %v594, %v642
        %v651 = vmul.f32 %v643, 1.442695
        %v652 = vpow.pop %v651
        %v653 = vmul.f32 %v644, 1.442695
        %v654 = vpow.pop %v653
        %v655 = vmul.f32 %v645, 1.442695
        %v656 = vpow.pop %v655
        %v657 = vmul.f32 %v646, 1.442695
        %v658 = vpow.pop %v657
        %v659 = vmul.f32 %v647, 1.442695
        %v660 = vpow.pop %v659
        %v661 = vmul.f32 %v648, 1.442695
        %v662 = vpow.pop %v661
        %v663 = vmul.f32 %v649, 1.442695
        %v664 = vpow.pop %v663
        %v665 = vmul.f32 %v650, 1.442695
        %v666 = vpow.pop %v665
        %v667 = vrot.slane %v652, 4
        %v668 = vadd.f32 %v652, %v667
        %v669 = vrot.slane %v668, 2
        %v670 = vadd.f32 %v668, %v669
        %v671 = vrot.slane %v670, 1
        %v672 = vadd.f32 %v670, %v671
        %v673 = vrot.slane %v654, 4
        %v674 = vadd.f32 %v654, %v673
        %v675 = vrot.slane %v674, 2
        %v676 = vadd.f32 %v674, %v675
        %v677 = vrot.slane %v676, 1
        %v678 = vadd.f32 %v676, %v677
        %v679 = vrot.slane %v656, 4
        %v680 = vadd.f32 %v656, %v679
        %v681 = vrot.slane %v680, 2
        %v682 = vadd.f32 %v680, %v681
        %v683 = vrot.slane %v682, 1
        %v684 = vadd.f32 %v682, %v683
        %v685 = vrot.slane %v658, 4
        %v686 = vadd.f32 %v658, %v685
        %v687 = vrot.slane %v686, 2
        %v688 = vadd.f32 %v686, %v687
        %v689 = vrot.slane %v688, 1
        %v690 = vadd.f32 %v688, %v689
        %v691 = vrot.slane %v660, 4
        %v692 = vadd.f32 %v660, %v691
        %v693 = vrot.slane %v692, 2
        %v694 = vadd.f32 %v692, %v693
        %v695 = vrot.slane %v694, 1
        %v696 = vadd.f32 %v694, %v695
        %v697 = vrot.slane %v662, 4
        %v698 = vadd.f32 %v662, %v697
        %v699 = vrot.slane %v698, 2
        %v700 = vadd.f32 %v698, %v699
        %v701 = vrot.slane %v700, 1
        %v702 = vadd.f32 %v700, %v701
        %v703 = vrot.slane %v664, 4
        %v704 = vadd.f32 %v664, %v703
        %v705 = vrot.slane %v704, 2
        %v706 = vadd.f32 %v704, %v705
        %v707 = vrot.slane %v706, 1
        %v708 = vadd.f32 %v706, %v707
        %v709 = vrot.slane %v666, 4
        %v710 = vadd.f32 %v666, %v709
        %v711 = vrot.slane %v710, 2
        %v712 = vadd.f32 %v710, %v711
        %v713 = vrot.slane %v712, 1
        %v714 = vadd.f32 %v712, %v713
        %v715 = vrcp.pop %v672
        %v716 = vrcp.pop %v678
        %v717 = vrcp.pop %v684
        %v718 = vrcp.pop %v690
        %v719 = vrcp.pop %v696
        %v720 = vrcp.pop %v702
        %v721 = vrcp.pop %v708
        %v722 = vrcp.pop %v714
        %v723 = vmul.f32 %v652, %v715
        %v724 = vmul.f32 %v654, %v716
        %v725 = vmul.f32 %v656, %v717
        %v726 = vmul.f32 %v658, %v718
        %v727 = vmul.f32 %v660, %v719
        %v728 = vmul.f32 %v662, %v720
        %v729 = vmul.f32 %v664, %v721
        %v730 = vmul.f32 %v666, %v722
        %v731 = vmul.f32 %v723, %v559
        %v732 = vmul.f32 %v724, %v560
        %v733 = vmul.f32 %v725, %v561
        %v734 = vmul.f32 %v726, %v562
        %v735 = vmul.f32 %v727, %v563
        %v736 = vmul.f32 %v728, %v564
        %v737 = vmul.f32 %v729, %v565
        %v738 = vmul.f32 %v730, %v566
        %v739 = vrot.slane %v731, 4
        %v740 = vadd.f32 %v731, %v739
        %v741 = vrot.slane %v740, 2
        %v742 = vadd.f32 %v740, %v741
        %v743 = vrot.slane %v742, 1
        %v744 = vadd.f32 %v742, %v743
        %v745 = vrot.slane %v732, 4
        %v746 = vadd.f32 %v732, %v745
        %v747 = vrot.slane %v746, 2
        %v748 = vadd.f32 %v746, %v747
        %v749 = vrot.slane %v748, 1
        %v750 = vadd.f32 %v748, %v749
        %v751 = vrot.slane %v733, 4
        %v752 = vadd.f32 %v733, %v751
        %v753 = vrot.slane %v752, 2
        %v754 = vadd.f32 %v752, %v753
        %v755 = vrot.slane %v754, 1
        %v756 = vadd.f32 %v754, %v755
        %v757 = vrot.slane %v734, 4
        %v758 = vadd.f32 %v734, %v757
        %v759 = vrot.slane %v758, 2
        %v760 = vadd.f32 %v758, %v759
        %v761 = vrot.slane %v760, 1
        %v762 = vadd.f32 %v760, %v761
        %v763 = vrot.slane %v735, 4
        %v764 = vadd.f32 %v735, %v763
        %v765 = vrot.slane %v764, 2
        %v766 = vadd.f32 %v764, %v765
        %v767 = vrot.slane %v766, 1
        %v768 = vadd.f32 %v766, %v767
        %v769 = vrot.slane %v736, 4
        %v770 = vadd.f32 %v736, %v769
        %v771 = vrot.slane %v770, 2
        %v772 = vadd.f32 %v770, %v771
        %v773 = vrot.slane %v772, 1
        %v774 = vadd.f32 %v772, %v773
        %v775 = vrot.slane %v737, 4
        %v776 = vadd.f32 %v737, %v775
        %v777 = vrot.slane %v776, 2
        %v778 = vadd.f32 %v776, %v777
        %v779 = vrot.slane %v778, 1
        %v780 = vadd.f32 %v778, %v779
        %v781 = vrot.slane %v738, 4
        %v782 = vadd.f32 %v738, %v781
        %v783 = vrot.slane %v782, 2
        %v784 = vadd.f32 %v782, %v783
        %v785 = vrot.slane %v784, 1
        %v786 = vadd.f32 %v784, %v785
        %v787 = vld [vmem:[%s2] sm:$0xff]
        %v788 = vld [vmem:[%s2 + $0x8] sm:$0xff]
        %v789 = vld [vmem:[%s2 + $0x10] sm:$0xff]
        %v790 = vld [vmem:[%s2 + $0x18] sm:$0xff]
        %v791 = vld [vmem:[%s2 + $0x20] sm:$0xff]
        %v792 = vld [vmem:[%s2 + $0x28] sm:$0xff]
        %v793 = vld [vmem:[%s2 + $0x30] sm:$0xff]
        %v794 = vld [vmem:[%s2 + $0x38] sm:$0xff]
        %v795 = vld [vmem:[%s2 + $0x40] sm:$0xff]
        %v796 = vld [vmem:[%s2 + $0x48] sm:$0xff]
        %v797 = vld [vmem:[%s2 + $0x50] sm:$0xff]
        %v798 = vld [vmem:[%s2 + $0x58] sm:$0xff]
        %v799 = vld [vmem:[%s2 + $0x60] sm:$0xff]
        %v800 = vld [vmem:[%s2 + $0x68] sm:$0xff]
        %v801 = vld [vmem:[%s2 + $0x70] sm:$0xff]
        %v802 = vld [vmem:[%s2 + $0x78] sm:$0xff]
        %v803 = vlaneseq
        %v804 = vshrl.u32 %v803, 7
        %v805 = vsub.s32 0, %v804
        %v806 = vrot.slane %v404, %v805
        %vm815 = vcmask 1041409
        %v816 = vsel %vm815, %v750, %v744
        %vm817 = vcmask 1042434
        %v818 = vsel %vm817, %v756, %v816
        %vm819 = vcmask 1043459
        %v820 = vsel %vm819, %v762, %v818
        %vm821 = vcmask 1044484
        %v822 = vsel %vm821, %v768, %v820
        %vm823 = vcmask 1045509
        %v824 = vsel %vm823, %v774, %v822
        %vm825 = vcmask 1046534
        %v826 = vsel %vm825, %v780, %v824
        %vm827 = vcmask 1047559
        %v828 = vsel %vm827, %v786, %v826
        %830 = vmatprep.subr.mxu0 0.0
        %831 = vmatpush1.msra.mxu0 %v787
        %832 = vmatprep.subr.mxu0 0.0
        %833 = vmatpush1.msra.mxu0 %v788
        %834 = vmatprep.subr.mxu0 0.0
        %835 = vmatpush1.msra.mxu0 %v789
        %836 = vmatprep.subr.mxu0 0.0
        %837 = vmatpush1.msra.mxu0 %v790
        %838 = vmatprep.subr.mxu0 0.0
        %839 = vmatpush1.msra.mxu0 %v791
        %840 = vmatprep.subr.mxu0 0.0
        %841 = vmatpush1.msra.mxu0 %v792
        %842 = vmatprep.subr.mxu0 0.0
        %843 = vmatpush1.msra.mxu0 %v793
        %844 = vmatprep.subr.mxu0 0.0
        %845 = vmatpush1.msra.mxu0 %v794
        %846 = vmatprep.subr.mxu0 0.0
        %847 = vmatpush1.msra.mxu0 %v795
        %848 = vmatprep.subr.mxu0 0.0
        %849 = vmatpush1.msra.mxu0 %v796
        %850 = vmatprep.subr.mxu0 0.0
        %851 = vmatpush1.msra.mxu0 %v797
        %852 = vmatprep.subr.mxu0 0.0
        %853 = vmatpush1.msra.mxu0 %v798
        %854 = vmatprep.subr.mxu0 0.0
        %855 = vmatpush1.msra.mxu0 %v799
        %856 = vmatprep.subr.mxu0 0.0
        %857 = vmatpush1.msra.mxu0 %v800
        %858 = vmatprep.subr.mxu0 0.0
        %859 = vmatpush1.msra.mxu0 %v801
        %860 = vmatprep.subr.mxu0 0.0
        %861 = vmatpush1.msra.mxu0 %v802
        %862 = vmatprep.subr.mxu0 0.0
        %863 = vmatpush1.msra.mxu0 0.0
        %864 = vmatprep.subr.mxu0 0.0
        %865 = vmatpush1.msra.mxu0 0.0
        %866 = vmatprep.subr.mxu0 0.0
        %867 = vmatpush1.msra.mxu0 0.0
        %868 = vmatprep.subr.mxu0 0.0
        %869 = vmatpush1.msra.mxu0 0.0
        %870 = vmatprep.subr.mxu0 0.0
        %871 = vmatpush1.msra.mxu0 0.0
        %872 = vmatprep.subr.mxu0 0.0
        %873 = vmatpush1.msra.mxu0 0.0
        %874 = vmatprep.subr.mxu0 0.0
        %875 = vmatpush1.msra.mxu0 0.0
        %876 = vmatprep.subr.mxu0 0.0
        %877 = vmatpush1.msra.mxu0 0.0
        %878 = vmatprep.subr.mxu0 0.0
        %879 = vmatpush1.msra.mxu0 0.0
        %880 = vmatprep.subr.mxu0 0.0
        %881 = vmatpush1.msra.mxu0 0.0
        %882 = vmatprep.subr.mxu0 0.0
        %883 = vmatpush1.msra.mxu0 0.0
        %884 = vmatprep.subr.mxu0 0.0
        %885 = vmatpush1.msra.mxu0 0.0
        %886 = vmatprep.subr.mxu0 0.0
        %887 = vmatpush1.msra.mxu0 0.0
        %888 = vmatprep.subr.mxu0 0.0
        %889 = vmatpush1.msra.mxu0 0.0
        %890 = vmatprep.subr.mxu0 0.0
        %891 = vmatpush1.msra.mxu0 0.0
        %892 = vmatprep.subr.mxu0 0.0
        %893 = vmatpush1.msra.mxu0 0.0
        %894 = vmatprep.mubr.f32.mxu0 0.0
        %895 = vmatmul.mubr.f32.gmra.mrb[0].mxu0 %v828
        %v896 = vpop.f32.mrb[0].mxu0
        %v897 = vadd.f32 %v806, %v896
        %v898 = vpop.f32.mrb[0].mxu0
        %899 = vdwg.mxu0
        %900 = vst [vmem:[%s191] sm:$0xff] %v897
        %s901 = sand.u32 %s115, 1
        %s902 = scalar_lea.sflag [#allocation3], %s901
        %s903 = sand.u32 %s115, 1
        %s904 = smul.addr %s903, 8
        %s905 = scalar_lea.vmem [#allocation2], %s904
        // Predicated region
        $region37: #{path_attention_forward.1} parent=35 // pred_check
          %p906 = pneg %p125
        $region38: #{path_attention_forward.1} parent=35 // pred_check_branch
          %908 = sbr.rel (%p906) target = $region40
        $region39: #{path_attention_forward.1} parent=35 // pred_region
          %s910 = ssub.s32 128, 128
          %911 = vsyncadd %s902, %s910
          %s912 = smul.addr %s18, 128
          %s913 = scalar_lea.hbm %s4, %s912
          %s915 = sshll.u32 %s905, 4
          %s916 = int_to_ptr.vmem [resolvable:$true] %s915
          %918 = dma.vmem_to_hbm [thread:$0]  %s916, 128, %s913, %s902
        $region40: #{path_attention_forward.1} parent=35 // pred_fallthru
          _
      $region36: #{path_attention_forward.1} parent=5 // pred_fallthru
        _
      %p919 = scmp.le.s32.totalorder 2, %s13
      // Predicated region
      $region41: #{path_attention_forward.1} parent=5 // pred_check
        %p920 = pneg %p919
      $region42: #{path_attention_forward.1} parent=5 // pred_check_branch
        %922 = sbr.rel (%p920) target = $region44
      $region43: #{path_attention_forward.1} parent=5 // pred_region
        %s923 = ssub.s32 %s13, 2
        // Predicated region
        $region45: #{path_attention_forward.1} parent=43 // pred_check
          %p924 = pneg %p131
        $region46: #{path_attention_forward.1} parent=43 // pred_check_branch
          %926 = sbr.rel (%p924) target = $region48
        $region47: #{path_attention_forward.1} parent=43 // pred_region
          %s927 = sand.u32 %s116, 1
          %s928 = scalar_lea.sflag [#allocation3], %s927
          %s929 = sand.u32 %s116, 1
          %s930 = smul.addr %s929, 8
          %s931 = scalar_lea.vmem [#allocation2], %s930
          %932 = dma.done %s928, 128
        $region48: #{path_attention_forward.1} parent=43 // pred_fallthru
          _
      $region44: #{path_attention_forward.1} parent=5 // pred_fallthru
        _
    $region6: #{path_attention_forward.1} parent=1 // loop_footer
      %s17 = sadd.s32 1, %s13
    $region7: #{path_attention_forward.1} parent=1 // loop_footer_branch
      %12 = sbr.rel target = $region3
    $region8: #{path_attention_forward.1} parent=1 // loop_exit
      _
    %933 = vsyncpa [#allocation3], 1
    %s934 = scalar_lea.sflag [#allocation3], 1
    %935 = vsyncpa %s934, 1

</llo_original>
